<compile_context>
chip_gen: v5e
topology: v5e:2x2
jax: 0.10.0
libtpu: 0.0.40
codegen_flags: <defaults>
</compile_context>

<pallas_src>
import jax
import jax.numpy as jnp
from jax.experimental import pallas as pl
from jax.experimental.pallas import tpu as pltpu

_LANE = 128     # vreg lane width: feature dims padded to multiples of this
_SUBLANE = 8    # vreg sublane count: batch tiles padded to multiples of this


def _round_up(x, m):
    return ((x + m - 1) // m) * m


def _pad2d(a, rows, cols):
    r, c = a.shape
    if (r, c) == (rows, cols):
        return a
    return jnp.zeros((rows, cols), a.dtype).at[:r, :c].set(a)


def _make_mlp_kernel(num_hidden: int):
    """Fused MLP kernel: [Linear -> ReLU] * num_hidden -> Linear(., 1).

    Ref order:
      x, (W_0, b_0), ..., (W_{H-1}, b_{H-1}), w_last_row, b_last_row, out
    Hidden weights are (in_pad, out_pad), biases (1, out_pad), all zero padded.
    The final layer weight is passed as a (1, hidden_pad) row and computed as
    an elementwise multiply + lane reduction (VPU/XLU), leaving the MXU free.
    Dropout is identity at inference; BatchNorm is off (module default).
    """

    def kernel(*refs):
        x_ref = refs[0]
        o_ref = refs[-1]
        h = x_ref[...]
        # Static Python loop: layer count is compile-time; keeps LLO visibility
        # and avoids per-iteration broadcast_in_dim re-materialization.
        for i in range(num_hidden):
            w = refs[1 + 2 * i][...]            # (in_pad_i, out_pad_i)
            b = refs[2 + 2 * i][...]            # (1, out_pad_i)
            h = jnp.dot(h, w, preferred_element_type=jnp.float32) + b
            h = jnp.maximum(h, 0.0)             # ReLU (default activation)
        w_last = refs[1 + 2 * num_hidden][...]  # (1, hidden_pad)
        b_last = refs[2 + 2 * num_hidden][...]  # (1, 128) bias replicated
        y = jnp.sum(h * w_last, axis=-1, keepdims=True)   # (TB, 1) VPU/XLU
        # Broadcast across 128 lanes -> lane-dense store; col 0 sliced outside.
        o_ref[...] = (y + b_last).astype(o_ref.dtype)

    return kernel


def mlp_forward(x, params, tile_batch=None):
    """Net.forward (eval mode) as one fused, batch-tiled Pallas kernel.

    Args:
      x: (batch, input_size) float32.
      params: list of (W, b) with W of shape (in, out), b of shape (1, out).
        The final layer must have out == 1 (Net always ends in Linear(., 1)).
      tile_batch: optional batch tile size (rounded up to a multiple of 8).
    Returns:
      (batch, 1) float32 — identical to Net.forward with batch_norm=False
      and dropout in eval mode.
    """
    # TODO(synk): batch_norm=True and training-mode dropout are not modelled;
    # this is the inference path of the default Net configuration.
    assert len(params) >= 2, "Net always has >=1 hidden layer + final Linear"
    assert params[-1][0].shape[1] == 1, "final layer of Net is Linear(., 1)"

    batch, in_features = x.shape
    num_hidden = len(params) - 1

    # ---- Pad every feature dimension to a lane multiple (128). ----
    feat = [in_features] + [w.shape[1] for w, _ in params[:-1]]
    feat_pad = [_round_up(d, _LANE) for d in feat]

    padded_hidden = []
    for i in range(num_hidden):
        w, b = params[i]
        wp = _pad2d(w, feat_pad[i], feat_pad[i + 1])
        bp = _pad2d(b.reshape(1, -1), 1, feat_pad[i + 1])
        padded_hidden.append((wp, bp))

    w_last, b_last = params[-1]
    w_last_row = _pad2d(w_last[:, 0].reshape(1, -1), 1, feat_pad[-1])      # (1, hidden_pad)
    b_last_row = jnp.broadcast_to(
        b_last.reshape(1, 1).astype(jnp.float32), (1, _LANE))             # (1, 128)

    # ---- Pick a batch tile (multiple of 8) against a conservative VMEM
    # budget, sized for v7x's 64 MiB VMEM (32 MiB default scoped limit). ----
    weight_bytes = 4 * (sum(wp.size + bp.size for wp, bp in padded_hidden)
                        + w_last_row.size + b_last_row.size)
    act_cols = max(feat_pad + [_LANE])

    def _est_vmem(tb):
        return (2 * weight_bytes                # resident weights (worst case 2x buffered)
                + 2 * tb * feat_pad[0] * 4      # double-buffered x tiles
                + 2 * tb * _LANE * 4            # double-buffered out tiles
                + 3 * tb * act_cols * 4)        # intermediate activations + slack

    vmem_budget = 20 * 1024 * 1024
    if tile_batch is None:
        tb = max(_SUBLANE, min(512, _round_up(batch, _SUBLANE)))
        while tb > _SUBLANE and _est_vmem(tb) > vmem_budget:
            tb = max(_SUBLANE, _round_up(tb // 2, _SUBLANE))
    else:
        tb = max(_SUBLANE, _round_up(int(tile_batch), _SUBLANE))

    batch_pad = _round_up(batch, tb)
    x_pad = _pad2d(x, batch_pad, feat_pad[0])
    grid = (batch_pad // tb,)

    # ---- BlockSpecs: x/out tiled over batch; weights resident. ----
    const = lambda i: (0, 0)
    in_specs = [pl.BlockSpec((tb, feat_pad[0]), lambda i: (i, 0))]
    flat_args = [x_pad]
    for i, (wp, bp) in enumerate(padded_hidden):
        in_specs.append(pl.BlockSpec((feat_pad[i], feat_pad[i + 1]), const))
        in_specs.append(pl.BlockSpec((1, feat_pad[i + 1]), const))
        flat_args += [wp, bp]
    in_specs.append(pl.BlockSpec((1, feat_pad[-1]), const))
    in_specs.append(pl.BlockSpec((1, _LANE), const))
    flat_args += [w_last_row, b_last_row]

    out_specs = pl.BlockSpec((tb, _LANE), lambda i: (i, 0))

    vmem_limit = int(min(max(32 * 1024 * 1024, 2 * _est_vmem(tb)),
                         56 * 1024 * 1024))

    out_padded = pl.pallas_call(
        _make_mlp_kernel(num_hidden),
        out_shape=jax.ShapeDtypeStruct((batch_pad, _LANE), jnp.float32),
        grid=grid,
        in_specs=in_specs,
        out_specs=out_specs,
        compiler_params=pltpu.CompilerParams(
            dimension_semantics=("parallel",),
            vmem_limit_bytes=vmem_limit,
        ),
    )(*flat_args)

    # Every lane of a row holds the same value; slice column 0 and real rows.
    return out_padded[:batch, :1]


def init_params(key, input_size, layer_sizes):
    """Deterministic PyTorch-style (uniform +-1/sqrt(fan_in)) init.

    Returns list of (W, b): hidden Linear layers followed by Linear(h, 1).
    """
    dims = [input_size] + list(layer_sizes) + [1]
    params = []
    for i in range(len(dims) - 1):
        fan_in, fan_out = dims[i], dims[i + 1]
        key, kw, kb = jax.random.split(key, 3)
        bound = 1.0 / jnp.sqrt(jnp.float32(fan_in))
        w = jax.random.uniform(kw, (fan_in, fan_out), jnp.float32, -bound, bound)
        b = jax.random.uniform(kb, (1, fan_out), jnp.float32, -bound, bound)
        params.append((w, b))
    return params


def reference_forward(x, params):
    """Plain-JAX reference identical to Net.forward (eval mode)."""
    h = x
    for i, (w, b) in enumerate(params):
        h = h @ w + b
        if i < len(params) - 1:
            h = jnp.maximum(h, 0.0)
    return h


if __name__ == "__main__":
    # Small shapes consistent with the module's forward:
    #   input_size=32, layer_sizes=[64, 32], dropout_rates=[0.1, 0.1]
    batch = 16
    input_size = 32
    layer_sizes = [64, 32]

    key = jax.random.PRNGKey(0)
    key, kx = jax.random.split(key)
    x = jax.random.normal(kx, (batch, input_size), dtype=jnp.float32)
    params = init_params(key, input_size, layer_sizes)

    # tile_batch=8 -> grid of 2 steps, exercising the batch pipeline.
    out = mlp_forward(x, params, tile_batch=8)
    out = jax.block_until_ready(out)

    ref = reference_forward(x, params)
    assert out.shape == (batch, 1), out.shape
    assert jnp.allclose(out, ref, atol=1e-5, rtol=1e-5), (
        f"max abs err {jnp.max(jnp.abs(out - ref))}"
    )
    print("KERNEL_OK")
</pallas_src>

<mosaic_0001>
module attributes {stable_mosaic.version = 11 : i64} {
  func.func @kernel(%arg0: i32, %arg1: memref<8x128xf32, #tpu.memory_space<vmem>>, %arg2: memref<128x128xf32, #tpu.memory_space<vmem>>, %arg3: memref<1x128xf32, #tpu.memory_space<vmem>>, %arg4: memref<128x128xf32, #tpu.memory_space<vmem>>, %arg5: memref<1x128xf32, #tpu.memory_space<vmem>>, %arg6: memref<1x128xf32, #tpu.memory_space<vmem>>, %arg7: memref<1x128xf32, #tpu.memory_space<vmem>>, %arg8: memref<8x128xf32, #tpu.memory_space<vmem>>) attributes {dimension_semantics = [#tpu.dimension_semantics<parallel>], iteration_bounds = array<i64: 2>, scalar_prefetch = 0 : i64, scratch_operands = 0 : i64, tpu.core_type = #tpu.core_type<tc>, window_params = [{transform_indices = @transform_0, window_bounds = array<i64: 8, 128>}, {pipeline_mode = #tpu.pipeline_mode<synchronous>, transform_indices = @transform_1, window_bounds = array<i64: 128, 128>}, {pipeline_mode = #tpu.pipeline_mode<synchronous>, transform_indices = @transform_2, window_bounds = array<i64: 1, 128>}, {pipeline_mode = #tpu.pipeline_mode<synchronous>, transform_indices = @transform_3, window_bounds = array<i64: 128, 128>}, {pipeline_mode = #tpu.pipeline_mode<synchronous>, transform_indices = @transform_4, window_bounds = array<i64: 1, 128>}, {pipeline_mode = #tpu.pipeline_mode<synchronous>, transform_indices = @transform_5, window_bounds = array<i64: 1, 128>}, {pipeline_mode = #tpu.pipeline_mode<synchronous>, transform_indices = @transform_6, window_bounds = array<i64: 1, 128>}, {transform_indices = @transform_7, window_bounds = array<i64: 8, 128>}]} {
    %c0 = arith.constant 0 : index
    %c0_0 = arith.constant 0 : index
    %0 = vector.load %arg1[%c0, %c0_0] : memref<8x128xf32, #tpu.memory_space<vmem>>, vector<8x128xf32>
    %c0_1 = arith.constant 0 : index
    %c0_2 = arith.constant 0 : index
    %1 = vector.load %arg2[%c0_1, %c0_2] : memref<128x128xf32, #tpu.memory_space<vmem>>, vector<128x128xf32>
    %c0_3 = arith.constant 0 : index
    %c0_4 = arith.constant 0 : index
    %2 = vector.load %arg3[%c0_3, %c0_4] : memref<1x128xf32, #tpu.memory_space<vmem>>, vector<1x128xf32>
    %cst = arith.constant dense<0.000000e+00> : vector<8x128xf32>
    %3 = tpu.matmul %0, %1, %cst {dimension_numbers = #tpu.dot_dimension_numbers<[1], [0], [0], [1], [0, 0, 1, 1], [], []>} : vector<8x128xf32>, vector<128x128xf32>, vector<8x128xf32> -> vector<8x128xf32>
    %4 = vector.broadcast %2 : vector<1x128xf32> to vector<8x128xf32>
    %5 = arith.addf %3, %4 : vector<8x128xf32>
    %cst_5 = arith.constant 0.000000e+00 : f32
    %6 = vector.broadcast %cst_5 : f32 to vector<8x128xf32>
    %7 = arith.maximumf %5, %6 : vector<8x128xf32>
    %c0_6 = arith.constant 0 : index
    %c0_7 = arith.constant 0 : index
    %8 = vector.load %arg4[%c0_6, %c0_7] : memref<128x128xf32, #tpu.memory_space<vmem>>, vector<128x128xf32>
    %c0_8 = arith.constant 0 : index
    %c0_9 = arith.constant 0 : index
    %9 = vector.load %arg5[%c0_8, %c0_9] : memref<1x128xf32, #tpu.memory_space<vmem>>, vector<1x128xf32>
    %cst_10 = arith.constant dense<0.000000e+00> : vector<8x128xf32>
    %10 = tpu.matmul %7, %8, %cst_10 {dimension_numbers = #tpu.dot_dimension_numbers<[1], [0], [0], [1], [0, 0, 1, 1], [], []>} : vector<8x128xf32>, vector<128x128xf32>, vector<8x128xf32> -> vector<8x128xf32>
    %11 = vector.broadcast %9 : vector<1x128xf32> to vector<8x128xf32>
    %12 = arith.addf %10, %11 : vector<8x128xf32>
    %cst_11 = arith.constant 0.000000e+00 : f32
    %13 = vector.broadcast %cst_11 : f32 to vector<8x128xf32>
    %14 = arith.maximumf %12, %13 : vector<8x128xf32>
    %c0_12 = arith.constant 0 : index
    %c0_13 = arith.constant 0 : index
    %15 = vector.load %arg6[%c0_12, %c0_13] : memref<1x128xf32, #tpu.memory_space<vmem>>, vector<1x128xf32>
    %c0_14 = arith.constant 0 : index
    %c0_15 = arith.constant 0 : index
    %16 = vector.load %arg7[%c0_14, %c0_15] : memref<1x128xf32, #tpu.memory_space<vmem>>, vector<1x128xf32>
    %17 = vector.broadcast %15 : vector<1x128xf32> to vector<8x128xf32>
    %18 = arith.mulf %14, %17 : vector<8x128xf32>
    %cst_16 = arith.constant dense<0.000000e+00> : vector<8xf32>
    %19 = vector.multi_reduction <add>, %18, %cst_16 [1] : vector<8x128xf32> to vector<8xf32>
    %20 = vector.shape_cast %19 : vector<8xf32> to vector<8x1xf32>
    %21 = vector.broadcast %20 : vector<8x1xf32> to vector<8x128xf32>
    %22 = vector.broadcast %16 : vector<1x128xf32> to vector<8x128xf32>
    %23 = arith.addf %21, %22 : vector<8x128xf32>
    %c0_17 = arith.constant 0 : index
    %c0_18 = arith.constant 0 : index
    %24 = vector.load %arg8[%c0_17, %c0_18] : memref<8x128xf32, #tpu.memory_space<vmem>>, vector<8x128xf32>
    tpu.vector_store %arg8[%c0_17, %c0_18], %23 {strides = array<i32>} : memref<8x128xf32, #tpu.memory_space<vmem>>, vector<8x128xf32>,
    return
  }
  func.func @transform_0(%arg0: i32) -> (i32, i32) {
    %c0_i32 = arith.constant 0 : i32
    %c0_i32_0 = arith.constant 0 : i32
    return %arg0, %c0_i32 : i32, i32
  }
  func.func @transform_1(%arg0: i32) -> (i32, i32) {
    %c0_i32 = arith.constant 0 : i32
    %c0_i32_0 = arith.constant 0 : i32
    %c0_i32_1 = arith.constant 0 : i32
    return %c0_i32, %c0_i32_0 : i32, i32
  }
  func.func @transform_2(%arg0: i32) -> (i32, i32) {
    %c0_i32 = arith.constant 0 : i32
    %c0_i32_0 = arith.constant 0 : i32
    %c0_i32_1 = arith.constant 0 : i32
    return %c0_i32, %c0_i32_0 : i32, i32
  }
  func.func @transform_3(%arg0: i32) -> (i32, i32) {
    %c0_i32 = arith.constant 0 : i32
    %c0_i32_0 = arith.constant 0 : i32
    %c0_i32_1 = arith.constant 0 : i32
    return %c0_i32, %c0_i32_0 : i32, i32
  }
  func.func @transform_4(%arg0: i32) -> (i32, i32) {
    %c0_i32 = arith.constant 0 : i32
    %c0_i32_0 = arith.constant 0 : i32
    %c0_i32_1 = arith.constant 0 : i32
    return %c0_i32, %c0_i32_0 : i32, i32
  }
  func.func @transform_5(%arg0: i32) -> (i32, i32) {
    %c0_i32 = arith.constant 0 : i32
    %c0_i32_0 = arith.constant 0 : i32
    %c0_i32_1 = arith.constant 0 : i32
    return %c0_i32, %c0_i32_0 : i32, i32
  }
  func.func @transform_6(%arg0: i32) -> (i32, i32) {
    %c0_i32 = arith.constant 0 : i32
    %c0_i32_0 = arith.constant 0 : i32
    %c0_i32_1 = arith.constant 0 : i32
    return %c0_i32, %c0_i32_0 : i32, i32
  }
  func.func @transform_7(%arg0: i32) -> (i32, i32) {
    %c0_i32 = arith.constant 0 : i32
    %c0_i32_0 = arith.constant 0 : i32
    return %arg0, %c0_i32 : i32, i32
  }
}

</mosaic_0001>

<llo_original>
// kernel: tpu_custom_call.1
$region0: #{tpu_custom_call.1}
  #allocation0 [shape = 'u32[]', space=smem, size = 0x4, offset = 0x4, fixed_abs, tag = 'smem constant byte address 0x4 - core index']
  #allocation1 [shape = 'u32[72,128]{1,0:T(1,128)}', space=vmem, size = 0x9000, scoped, tag = 'internal scratch']
  %s0 = inlined_call_operand.hbm [shape: f32[16,128], index: 0, kind: input, shape index: {}]
  %s1 = inlined_call_operand.hbm [shape: f32[128,128], index: 1, kind: input, shape index: {}]
  %s2 = inlined_call_operand.vmem [shape: f32[1,128], index: 2, kind: input, shape index: {}]
  %s3 = inlined_call_operand.hbm [shape: f32[128,128], index: 3, kind: input, shape index: {}]
  %s4 = inlined_call_operand.vmem [shape: f32[1,128], index: 4, kind: input, shape index: {}]
  %s5 = inlined_call_operand.vmem [shape: f32[1,128], index: 5, kind: input, shape index: {}]
  %s6 = inlined_call_operand.vmem [shape: f32[1,128], index: 6, kind: input, shape index: {}]
  %s7 = inlined_call_operand.hbm [shape: f32[16,128], index: 7, kind: output, shape index: {}]
  %s8 = sld [smem:[#allocation0]]
  $region73: #{tpu_custom_call.1} parent=0
    _
  %s10 = ssub.s32 1, %s8
  %s11 = scalar_select 0, %s10, %s8
  $region1: #{tpu_custom_call.1} parent=0
    #allocation2 [shape = 'u8[8192]{0}', space=vmem, size = 0x2000, scoped, tag = 'input window, operand 0']
    #allocation3 [shape = 's32[2]{0}', space=sflag, size = 0x8, scoped, tag = 'scoped memory for tpu_custom_call.1']
    #allocation4 [shape = 's32[2]{0}', space=sflag, size = 0x8, scoped, tag = 'scoped memory for tpu_custom_call.1']
    #allocation5 [shape = 'u8[65536]{0}', space=vmem, size = 0x10000, scoped, tag = 'input window, operand 1, single buffered']
    #allocation6 [shape = 's32[1]{0}', space=sflag, size = 0x4, scoped, tag = 'scoped memory for tpu_custom_call.1']
    #allocation7 [shape = 'u8[65536]{0}', space=vmem, size = 0x10000, scoped, tag = 'input window, operand 3, single buffered']
    #allocation8 [shape = 'u8[8192]{0}', space=vmem, size = 0x2000, scoped, tag = 'output window, operand 0']
    %12 = vsyncpa [#allocation3], 0
    %s13 = scalar_lea.sflag [#allocation3], 1
    %14 = vsyncpa %s13, 0
    %15 = vsyncpa [#allocation6], 0
    %16 = vsyncpa [#allocation4], 0
    %s17 = scalar_lea.sflag [#allocation4], 1
    %18 = vsyncpa %s17, 0
    loop: start=0, step=1, limit=4
    $region2: #{tpu_custom_call.1} parent=1 // loop_pre_header
      _
    $region3: #{tpu_custom_call.1} parent=1 // loop_header
      %s20 = sphi 0, %s24
      %p21 = scmp.ge.s32.totalorder %s20, 4
      %s30 = sphi 0, %s32
      %s33 = sphi 0, %s30
      %s34 = sphi 0, %s33
      %s50 = sphi 0, %s34
      %s54 = sphi 0, %s54
      %s56 = sphi 0, %s54
      %s57 = sphi 0, %s56
      %s71 = sphi 0, %s57
      %s75 = sphi 0, %s75
      %s77 = sphi 0, %s75
      %s78 = sphi 0, %s77
      %s92 = sphi 0, %s78
      %s96 = sphi 0, %s96
      %s98 = sphi 0, %s96
      %s99 = sphi 0, %s98
      %s113 = sphi 0, %s99
      %s117 = sphi 0, %s117
      %s119 = sphi 0, %s117
      %s120 = sphi 0, %s119
      %s134 = sphi 0, %s120
      %s138 = sphi 0, %s138
      %s140 = sphi 0, %s138
      %s141 = sphi 0, %s140
      %s155 = sphi 0, %s141
      %s159 = sphi 0, %s159
      %s161 = sphi 0, %s159
      %s162 = sphi 0, %s161
      %s176 = sphi 0, %s162
      %s182 = sphi 0, %s184
      %s185 = sphi 0, %s182
      %s186 = sphi 0, %s185
      %s202 = sphi 0, %s186
    $region4: #{tpu_custom_call.1} parent=1 // loop_header_branch
      %23 = sbr.rel (%p21) target = $region8
    $region5: #{tpu_custom_call.1} parent=1 // loop_body
      %s25 = ssub.s32 %s20, 1
      %s26 = ssub.s32 %s20, 2
      %s27 = sadd.s32 %s20, 1
      %s28 = ssub.s32 %s20, %s27
      %p29 = scmp.eq.s32.totalorder %s28, 0
      %s31 = sadd.s32 %s30, 1
      %s32 = scalar_select %p29, %s30, %s31
      %p35 = pneg %p29
      %p36 = scmp.eq.s32.totalorder %s20, 1
      %p37 = por %p35, %p36
      %p38 = scmp.ne.s32.totalorder %s30, %s33
      %p39 = scmp.eq.s32.totalorder %s20, 0
      %p40 = por %p38, %p39
      %p41 = scmp.ne.s32.totalorder %s30, %s33
      %p42 = scmp.eq.s32.totalorder %s25, 1
      %p43 = por %p41, %p42
      %p44 = scmp.ne.s32.totalorder %s33, %s34
      %p45 = scmp.eq.s32.totalorder %s25, 0
      %p46 = por %p44, %p45
      %p47 = scmp.ne.s32.totalorder %s33, %s34
      %p48 = scmp.eq.s32.totalorder %s26, 1
      %p49 = por %p47, %p48
      %p51 = scmp.ne.s32.totalorder %s34, %s50
      %p52 = scmp.eq.s32.totalorder %s26, 0
      %p53 = por %p51, %p52
      %s55 = sadd.s32 %s54, 1
      %p58 = scmp.eq.s32.totalorder %s20, 1
      %p59 = scmp.ne.s32.totalorder %s54, %s56
      %p60 = scmp.eq.s32.totalorder %s20, 0
      %p61 = por %p59, %p60
      %p62 = scmp.ne.s32.totalorder %s54, %s56
      %p63 = scmp.eq.s32.totalorder %s25, 1
      %p64 = por %p62, %p63
      %p65 = scmp.ne.s32.totalorder %s56, %s57
      %p66 = scmp.eq.s32.totalorder %s25, 0
      %p67 = por %p65, %p66
      %p68 = scmp.ne.s32.totalorder %s56, %s57
      %p69 = scmp.eq.s32.totalorder %s26, 1
      %p70 = por %p68, %p69
      %p72 = scmp.ne.s32.totalorder %s57, %s71
      %p73 = scmp.eq.s32.totalorder %s26, 0
      %p74 = por %p72, %p73
      %s76 = sadd.s32 %s75, 1
      %p79 = scmp.eq.s32.totalorder %s20, 1
      %p80 = scmp.ne.s32.totalorder %s75, %s77
      %p81 = scmp.eq.s32.totalorder %s20, 0
      %p82 = por %p80, %p81
      %p83 = scmp.ne.s32.totalorder %s75, %s77
      %p84 = scmp.eq.s32.totalorder %s25, 1
      %p85 = por %p83, %p84
      %p86 = scmp.ne.s32.totalorder %s77, %s78
      %p87 = scmp.eq.s32.totalorder %s25, 0
      %p88 = por %p86, %p87
      %p89 = scmp.ne.s32.totalorder %s77, %s78
      %p90 = scmp.eq.s32.totalorder %s26, 1
      %p91 = por %p89, %p90
      %p93 = scmp.ne.s32.totalorder %s78, %s92
      %p94 = scmp.eq.s32.totalorder %s26, 0
      %p95 = por %p93, %p94
      %s97 = sadd.s32 %s96, 1
      %p100 = scmp.eq.s32.totalorder %s20, 1
      %p101 = scmp.ne.s32.totalorder %s96, %s98
      %p102 = scmp.eq.s32.totalorder %s20, 0
      %p103 = por %p101, %p102
      %p104 = scmp.ne.s32.totalorder %s96, %s98
      %p105 = scmp.eq.s32.totalorder %s25, 1
      %p106 = por %p104, %p105
      %p107 = scmp.ne.s32.totalorder %s98, %s99
      %p108 = scmp.eq.s32.totalorder %s25, 0
      %p109 = por %p107, %p108
      %p110 = scmp.ne.s32.totalorder %s98, %s99
      %p111 = scmp.eq.s32.totalorder %s26, 1
      %p112 = por %p110, %p111
      %p114 = scmp.ne.s32.totalorder %s99, %s113
      %p115 = scmp.eq.s32.totalorder %s26, 0
      %p116 = por %p114, %p115
      %s118 = sadd.s32 %s117, 1
      %p121 = scmp.eq.s32.totalorder %s20, 1
      %p122 = scmp.ne.s32.totalorder %s117, %s119
      %p123 = scmp.eq.s32.totalorder %s20, 0
      %p124 = por %p122, %p123
      %p125 = scmp.ne.s32.totalorder %s117, %s119
      %p126 = scmp.eq.s32.totalorder %s25, 1
      %p127 = por %p125, %p126
      %p128 = scmp.ne.s32.totalorder %s119, %s120
      %p129 = scmp.eq.s32.totalorder %s25, 0
      %p130 = por %p128, %p129
      %p131 = scmp.ne.s32.totalorder %s119, %s120
      %p132 = scmp.eq.s32.totalorder %s26, 1
      %p133 = por %p131, %p132
      %p135 = scmp.ne.s32.totalorder %s120, %s134
      %p136 = scmp.eq.s32.totalorder %s26, 0
      %p137 = por %p135, %p136
      %s139 = sadd.s32 %s138, 1
      %p142 = scmp.eq.s32.totalorder %s20, 1
      %p143 = scmp.ne.s32.totalorder %s138, %s140
      %p144 = scmp.eq.s32.totalorder %s20, 0
      %p145 = por %p143, %p144
      %p146 = scmp.ne.s32.totalorder %s138, %s140
      %p147 = scmp.eq.s32.totalorder %s25, 1
      %p148 = por %p146, %p147
      %p149 = scmp.ne.s32.totalorder %s140, %s141
      %p150 = scmp.eq.s32.totalorder %s25, 0
      %p151 = por %p149, %p150
      %p152 = scmp.ne.s32.totalorder %s140, %s141
      %p153 = scmp.eq.s32.totalorder %s26, 1
      %p154 = por %p152, %p153
      %p156 = scmp.ne.s32.totalorder %s141, %s155
      %p157 = scmp.eq.s32.totalorder %s26, 0
      %p158 = por %p156, %p157
      %s160 = sadd.s32 %s159, 1
      %p163 = scmp.eq.s32.totalorder %s20, 1
      %p164 = scmp.ne.s32.totalorder %s159, %s161
      %p165 = scmp.eq.s32.totalorder %s20, 0
      %p166 = por %p164, %p165
      %p167 = scmp.ne.s32.totalorder %s159, %s161
      %p168 = scmp.eq.s32.totalorder %s25, 1
      %p169 = por %p167, %p168
      %p170 = scmp.ne.s32.totalorder %s161, %s162
      %p171 = scmp.eq.s32.totalorder %s25, 0
      %p172 = por %p170, %p171
      %p173 = scmp.ne.s32.totalorder %s161, %s162
      %p174 = scmp.eq.s32.totalorder %s26, 1
      %p175 = por %p173, %p174
      %p177 = scmp.ne.s32.totalorder %s162, %s176
      %p178 = scmp.eq.s32.totalorder %s26, 0
      %p179 = por %p177, %p178
      %s180 = ssub.s32 %s20, %s27
      %p181 = scmp.eq.s32.totalorder %s180, 0
      %s183 = sadd.s32 %s182, 1
      %s184 = scalar_select %p181, %s182, %s183
      %p187 = pneg %p181
      %p188 = scmp.eq.s32.totalorder %s20, 1
      %p189 = por %p187, %p188
      %p190 = scmp.ne.s32.totalorder %s182, %s185
      %p191 = scmp.eq.s32.totalorder %s20, 0
      %p192 = por %p190, %p191
      %p193 = scmp.ne.s32.totalorder %s182, %s185
      %p194 = scmp.eq.s32.totalorder %s25, 1
      %p195 = por %p193, %p194
      %p196 = scmp.ne.s32.totalorder %s185, %s186
      %p197 = scmp.eq.s32.totalorder %s25, 0
      %p198 = por %p196, %p197
      %p199 = scmp.ne.s32.totalorder %s185, %s186
      %p200 = scmp.eq.s32.totalorder %s26, 1
      %p201 = por %p199, %p200
      %p203 = scmp.ne.s32.totalorder %s186, %s202
      %p204 = scmp.eq.s32.totalorder %s26, 0
      %p205 = por %p203, %p204
      %p206 = scmp.le.s32.totalorder 1, %s20
      %p207 = scmp.lt.s32.totalorder %s20, 3
      %p208 = pnand %p206, %p207
      %p209 = pneg %p208
      // Predicated region
      $region9: #{tpu_custom_call.1} parent=5 // pred_check
        _
      $region10: #{tpu_custom_call.1} parent=5 // pred_check_branch
        %211 = sbr.rel (%p208) target = $region12
      $region11: #{tpu_custom_call.1} parent=5 // pred_region
        %s212 = ssub.s32 %s20, 1
        // Predicated region
        $region13: #{tpu_custom_call.1} parent=11 // pred_check
          %p213 = pneg %p67
        $region14: #{tpu_custom_call.1} parent=11 // pred_check_branch
          %215 = sbr.rel (%p213) target = $region16
        $region15: #{tpu_custom_call.1} parent=11 // pred_region
          %217 = vsyncadd [#allocation6], 0
          %s218 = sshll.u32 %s1, 4
          %s219 = int_to_ptr.hbm [resolvable:$true] %s218
          %s220 = sshll.u32 [#allocation5], 4
          %s221 = int_to_ptr.vmem [resolvable:$true] %s220
          %226 = dma.hbm_to_vmem [thread:$0]  %s219, 2048, %s221, [#allocation6], 128, 128, 8
        $region16: #{tpu_custom_call.1} parent=11 // pred_fallthru
          _
        // Predicated region
        $region17: #{tpu_custom_call.1} parent=11 // pred_check
          %p227 = pneg %p88
        $region18: #{tpu_custom_call.1} parent=11 // pred_check_branch
          %229 = sbr.rel (%p227) target = $region20
        $region19: #{tpu_custom_call.1} parent=11 // pred_region
          _
        $region20: #{tpu_custom_call.1} parent=11 // pred_fallthru
          _
        // Predicated region
        $region21: #{tpu_custom_call.1} parent=11 // pred_check
          %p230 = pneg %p109
        $region22: #{tpu_custom_call.1} parent=11 // pred_check_branch
          %232 = sbr.rel (%p230) target = $region24
        $region23: #{tpu_custom_call.1} parent=11 // pred_region
          %234 = vsyncadd [#allocation6], 0
          %s235 = sshll.u32 %s3, 4
          %s236 = int_to_ptr.hbm [resolvable:$true] %s235
          %s237 = sshll.u32 [#allocation7], 4
          %s238 = int_to_ptr.vmem [resolvable:$true] %s237
          %243 = dma.hbm_to_vmem [thread:$0]  %s236, 2048, %s238, [#allocation6], 128, 128, 8
        $region24: #{tpu_custom_call.1} parent=11 // pred_fallthru
          _
        // Predicated region
        $region25: #{tpu_custom_call.1} parent=11 // pred_check
          %p244 = pneg %p130
        $region26: #{tpu_custom_call.1} parent=11 // pred_check_branch
          %246 = sbr.rel (%p244) target = $region28
        $region27: #{tpu_custom_call.1} parent=11 // pred_region
          _
        $region28: #{tpu_custom_call.1} parent=11 // pred_fallthru
          _
        // Predicated region
        $region29: #{tpu_custom_call.1} parent=11 // pred_check
          %p247 = pneg %p151
        $region30: #{tpu_custom_call.1} parent=11 // pred_check_branch
          %249 = sbr.rel (%p247) target = $region32
        $region31: #{tpu_custom_call.1} parent=11 // pred_region
          _
        $region32: #{tpu_custom_call.1} parent=11 // pred_fallthru
          _
        // Predicated region
        $region33: #{tpu_custom_call.1} parent=11 // pred_check
          %p250 = pneg %p172
        $region34: #{tpu_custom_call.1} parent=11 // pred_check_branch
          %252 = sbr.rel (%p250) target = $region36
        $region35: #{tpu_custom_call.1} parent=11 // pred_region
          _
        $region36: #{tpu_custom_call.1} parent=11 // pred_fallthru
          _
      $region12: #{tpu_custom_call.1} parent=5 // pred_fallthru
        _
      %p253 = scmp.lt.s32.totalorder %s20, 2
      // Predicated region
      $region37: #{tpu_custom_call.1} parent=5 // pred_check
        %p254 = pneg %p253
      $region38: #{tpu_custom_call.1} parent=5 // pred_check_branch
        %256 = sbr.rel (%p254) target = $region40
      $region39: #{tpu_custom_call.1} parent=5 // pred_region
        // Predicated region
        $region41: #{tpu_custom_call.1} parent=39 // pred_check
          %p257 = pneg %p40
        $region42: #{tpu_custom_call.1} parent=39 // pred_check_branch
          %259 = sbr.rel (%p257) target = $region44
        $region43: #{tpu_custom_call.1} parent=39 // pred_region
          %s260 = sand.u32 %s30, 1
          %s261 = scalar_lea.sflag [#allocation3], %s260
          %s262 = sand.u32 %s30, 1
          %s263 = smul.addr %s262, 8
          %s264 = scalar_lea.vmem [#allocation2], %s263
          %266 = vsyncadd %s261, 0
          %s267 = smul.addr %s20, 8
          %s268 = scalar_lea.hbm %s0, %s267
          %s270 = sshll.u32 %s268, 4
          %s271 = int_to_ptr.hbm [resolvable:$true] %s270
          %s272 = sshll.u32 %s264, 4
          %s273 = int_to_ptr.vmem [resolvable:$true] %s272
          %275 = dma.hbm_to_vmem [thread:$0]  %s271, 128, %s273, %s261
        $region44: #{tpu_custom_call.1} parent=39 // pred_fallthru
          _
      $region40: #{tpu_custom_call.1} parent=5 // pred_fallthru
        _
      %p276 = scmp.le.s32.totalorder 1, %s20
      %p277 = scmp.lt.s32.totalorder %s20, 3
      %p278 = pnand %p276, %p277
      %p279 = pneg %p278
      // Predicated region
      $region45: #{tpu_custom_call.1} parent=5 // pred_check
        _
      $region46: #{tpu_custom_call.1} parent=5 // pred_check_branch
        %281 = sbr.rel (%p278) target = $region48
      $region47: #{tpu_custom_call.1} parent=5 // pred_region
        %s282 = ssub.s32 %s20, 1
        %s283 = sand.u32 %s33, 1
        %s284 = scalar_lea.sflag [#allocation3], %s283
        %s285 = sand.u32 %s33, 1
        %s286 = smul.addr %s285, 8
        %s287 = scalar_lea.vmem [#allocation2], %s286
        // Predicated region
        $region49: #{tpu_custom_call.1} parent=47 // pred_check
          %p288 = pneg %p46
        $region50: #{tpu_custom_call.1} parent=47 // pred_check_branch
          %290 = sbr.rel (%p288) target = $region52
        $region51: #{tpu_custom_call.1} parent=47 // pred_region
          %292 = dma.done %s284, 128
        $region52: #{tpu_custom_call.1} parent=47 // pred_fallthru
          _
        // Predicated region
        $region53: #{tpu_custom_call.1} parent=47 // pred_check
          %p293 = pneg %p67
        $region54: #{tpu_custom_call.1} parent=47 // pred_check_branch
          %295 = sbr.rel (%p293) target = $region56
        $region55: #{tpu_custom_call.1} parent=47 // pred_region
          %297 = dma.done [#allocation6], 2048
        $region56: #{tpu_custom_call.1} parent=47 // pred_fallthru
          _
        // Predicated region
        $region57: #{tpu_custom_call.1} parent=47 // pred_check
          %p298 = pneg %p109
        $region58: #{tpu_custom_call.1} parent=47 // pred_check_branch
          %300 = sbr.rel (%p298) target = $region60
        $region59: #{tpu_custom_call.1} parent=47 // pred_region
          %302 = dma.done [#allocation6], 2048
        $region60: #{tpu_custom_call.1} parent=47 // pred_fallthru
          _
        %s303 = sand.u32 %s33, 1
        %s304 = scalar_lea.sflag [#allocation3], %s303
        %s305 = sand.u32 %s33, 1
        %s306 = smul.addr %s305, 8
        %s307 = scalar_lea.vmem [#allocation2], %s306
        %p308 = pneg %p46
        %p309 = pneg %p43
        %p310 = pneg %p67
        %p311 = pneg %p64
        %p312 = pneg %p88
        %p313 = pneg %p85
        %p314 = pneg %p109
        %p315 = pneg %p106
        %p316 = pneg %p130
        %p317 = pneg %p127
        %p318 = pneg %p151
        %p319 = pneg %p148
        %p320 = pneg %p172
        %p321 = pneg %p169
        %p322 = pneg %p198
        %p323 = pneg %p195
        %s324 = sand.u32 %s185, 1
        %s325 = scalar_lea.sflag [#allocation4], %s324
        %s326 = sand.u32 %s185, 1
        %s327 = smul.addr %s326, 8
        %s328 = scalar_lea.vmem [#allocation8], %s327
        %v329 = vld [vmem:[%s287] sm:$0xff]
        %v330 = vld [vmem:[#allocation5] sm:$0xff]
        %v331 = vld [vmem:[#allocation5 + $0x8] sm:$0xff]
        %v332 = vld [vmem:[#allocation5 + $0x10] sm:$0xff]
        %v333 = vld [vmem:[#allocation5 + $0x18] sm:$0xff]
        %v334 = vld [vmem:[#allocation5 + $0x20] sm:$0xff]
        %v335 = vld [vmem:[#allocation5 + $0x28] sm:$0xff]
        %v336 = vld [vmem:[#allocation5 + $0x30] sm:$0xff]
        %v337 = vld [vmem:[#allocation5 + $0x38] sm:$0xff]
        %v338 = vld [vmem:[#allocation5 + $0x40] sm:$0xff]
        %v339 = vld [vmem:[#allocation5 + $0x48] sm:$0xff]
        %v340 = vld [vmem:[#allocation5 + $0x50] sm:$0xff]
        %v341 = vld [vmem:[#allocation5 + $0x58] sm:$0xff]
        %v342 = vld [vmem:[#allocation5 + $0x60] sm:$0xff]
        %v343 = vld [vmem:[#allocation5 + $0x68] sm:$0xff]
        %v344 = vld [vmem:[#allocation5 + $0x70] sm:$0xff]
        %v345 = vld [vmem:[#allocation5 + $0x78] sm:$0xff]
        %v346 = vld [vmem:[%s2] sm:$0x1]
        %v348 = vperm.slane %v346, 0
        %350 = vmatpush.msra.mxu0 %v345
        %351 = vmatpush.msra.mxu0 %v344
        %352 = vmatpush.msra.mxu0 %v343
        %353 = vmatpush.msra.mxu0 %v342
        %354 = vmatpush.msra.mxu0 %v341
        %355 = vmatpush.msra.mxu0 %v340
        %356 = vmatpush.msra.mxu0 %v339
        %357 = vmatpush.msra.mxu0 %v338
        %358 = vmatpush.msra.mxu0 %v337
        %359 = vmatpush.msra.mxu0 %v336
        %360 = vmatpush.msra.mxu0 %v335
        %361 = vmatpush.msra.mxu0 %v334
        %362 = vmatpush.msra.mxu0 %v333
        %363 = vmatpush.msra.mxu0 %v332
        %364 = vmatpush.msra.mxu0 %v331
        %365 = vmatpush.msra.mxu0 %v330
        %366 = vmatmul.f32.gmra.mxu0 %v329
        %v367 = vpop.f32.mrf.mxu0
        %v368 = vadd.f32 %v348, %v367
        %369 = vdwg.mxu0
        %v370 = vmax.f32 %v368, 0.0
        %v371 = vld [vmem:[#allocation7] sm:$0xff]
        %v372 = vld [vmem:[#allocation7 + $0x8] sm:$0xff]
        %v373 = vld [vmem:[#allocation7 + $0x10] sm:$0xff]
        %v374 = vld [vmem:[#allocation7 + $0x18] sm:$0xff]
        %v375 = vld [vmem:[#allocation7 + $0x20] sm:$0xff]
        %v376 = vld [vmem:[#allocation7 + $0x28] sm:$0xff]
        %v377 = vld [vmem:[#allocation7 + $0x30] sm:$0xff]
        %v378 = vld [vmem:[#allocation7 + $0x38] sm:$0xff]
        %v379 = vld [vmem:[#allocation7 + $0x40] sm:$0xff]
        %v380 = vld [vmem:[#allocation7 + $0x48] sm:$0xff]
        %v381 = vld [vmem:[#allocation7 + $0x50] sm:$0xff]
        %v382 = vld [vmem:[#allocation7 + $0x58] sm:$0xff]
        %v383 = vld [vmem:[#allocation7 + $0x60] sm:$0xff]
        %v384 = vld [vmem:[#allocation7 + $0x68] sm:$0xff]
        %v385 = vld [vmem:[#allocation7 + $0x70] sm:$0xff]
        %v386 = vld [vmem:[#allocation7 + $0x78] sm:$0xff]
        %v387 = vld [vmem:[%s4] sm:$0x1]
        %v389 = vperm.slane %v387, 0
        %391 = vmatpush.msra.mxu0 %v386
        %392 = vmatpush.msra.mxu0 %v385
        %393 = vmatpush.msra.mxu0 %v384
        %394 = vmatpush.msra.mxu0 %v383
        %395 = vmatpush.msra.mxu0 %v382
        %396 = vmatpush.msra.mxu0 %v381
        %397 = vmatpush.msra.mxu0 %v380
        %398 = vmatpush.msra.mxu0 %v379
        %399 = vmatpush.msra.mxu0 %v378
        %400 = vmatpush.msra.mxu0 %v377
        %401 = vmatpush.msra.mxu0 %v376
        %402 = vmatpush.msra.mxu0 %v375
        %403 = vmatpush.msra.mxu0 %v374
        %404 = vmatpush.msra.mxu0 %v373
        %405 = vmatpush.msra.mxu0 %v372
        %406 = vmatpush.msra.mxu0 %v371
        %407 = vmatmul.f32.gmra.mxu0 %v370
        %v408 = vpop.f32.mrf.mxu0
        %v409 = vadd.f32 %v389, %v408
        %410 = vdwg.mxu0
        %v411 = vmax.f32 %v409, 0.0
        %v412 = vld [vmem:[%s5] sm:$0x1]
        %v413 = vld [vmem:[%s6] sm:$0x1]
        %v415 = vperm.slane %v412, 0
        %v417 = vmul.f32 %v411, %v415
        %418 = vadd.xlane.f32.xlu0 %v417
        %v419 = vpop.xlane.xlu0 %418
        %v421 = vperm.slane %v413, 0
        %v423 = vadd.f32 %v419, %v421
        %424 = vst [vmem:[%s328] sm:$0xff] %v423
        %s425 = sand.u32 %s185, 1
        %s426 = scalar_lea.sflag [#allocation4], %s425
        %s427 = sand.u32 %s185, 1
        %s428 = smul.addr %s427, 8
        %s429 = scalar_lea.vmem [#allocation8], %s428
        // Predicated region
        $region61: #{tpu_custom_call.1} parent=47 // pred_check
          %p430 = pneg %p195
        $region62: #{tpu_custom_call.1} parent=47 // pred_check_branch
          %432 = sbr.rel (%p430) target = $region64
        $region63: #{tpu_custom_call.1} parent=47 // pred_region
          %434 = vsyncadd %s426, 0
          %s435 = smul.addr %s25, 8
          %s436 = scalar_lea.hbm %s7, %s435
          %s438 = sshll.u32 %s429, 4
          %s439 = int_to_ptr.vmem [resolvable:$true] %s438
          %s440 = sshll.u32 %s436, 4
          %s441 = int_to_ptr.hbm [resolvable:$true] %s440
          %443 = dma.vmem_to_hbm [thread:$0]  %s439, 128, %s441, %s426
        $region64: #{tpu_custom_call.1} parent=47 // pred_fallthru
          _
      $region48: #{tpu_custom_call.1} parent=5 // pred_fallthru
        _
      %p444 = scmp.le.s32.totalorder 2, %s20
      // Predicated region
      $region65: #{tpu_custom_call.1} parent=5 // pred_check
        %p445 = pneg %p444
      $region66: #{tpu_custom_call.1} parent=5 // pred_check_branch
        %447 = sbr.rel (%p445) target = $region68
      $region67: #{tpu_custom_call.1} parent=5 // pred_region
        %s448 = ssub.s32 %s20, 2
        // Predicated region
        $region69: #{tpu_custom_call.1} parent=67 // pred_check
          %p449 = pneg %p201
        $region70: #{tpu_custom_call.1} parent=67 // pred_check_branch
          %451 = sbr.rel (%p449) target = $region72
        $region71: #{tpu_custom_call.1} parent=67 // pred_region
          %s452 = sand.u32 %s186, 1
          %s453 = scalar_lea.sflag [#allocation4], %s452
          %s454 = sand.u32 %s186, 1
          %s455 = smul.addr %s454, 8
          %s456 = scalar_lea.vmem [#allocation8], %s455
          %458 = dma.done %s453, 128
        $region72: #{tpu_custom_call.1} parent=67 // pred_fallthru
          _
      $region68: #{tpu_custom_call.1} parent=5 // pred_fallthru
        _
    $region6: #{tpu_custom_call.1} parent=1 // loop_footer
      %s24 = sadd.s32 1, %s20
    $region7: #{tpu_custom_call.1} parent=1 // loop_footer_branch
      %19 = sbr.rel target = $region3
    $region8: #{tpu_custom_call.1} parent=1 // loop_exit
      _
    %459 = vsyncpa [#allocation3], 1
    %s460 = scalar_lea.sflag [#allocation3], 1
    %461 = vsyncpa %s460, 1
    %462 = vsyncpa [#allocation6], 1
    %463 = vsyncpa [#allocation4], 1
    %s464 = scalar_lea.sflag [#allocation4], 1
    %465 = vsyncpa %s464, 1

</llo_original>
